<compile_context>
chip_gen: v6e
topology: v6e:2x2x1
jax: 0.10.0
libtpu: 0.0.40
codegen_flags: <defaults>
</compile_context>

<pallas_src>
import functools

import jax
import jax.numpy as jnp
from jax.experimental import pallas as pl
from jax.experimental.pallas import tpu as pltpu  # noqa: F401  (imported per convention)


# --------------------------------------------------------------------------
# Fused kernel: task-query gather + expert MLPs + key/value projections +
#               attention over experts + cosine-similarity regularizer.
# All experts are packed along the lane axis (E*H = 128 lanes).
# --------------------------------------------------------------------------
def moe_kernel(task_ref, x_ref, w1_ref, b1_ref, w2_ref, b2_ref, kv_ref,
               tq_ref, tower_ref, reg_ref, *, num_experts, hidden, mu):
    E, H = num_experts, hidden
    EH = E * H
    K = x_ref.shape[0]
    num_tasks = tq_ref.shape[0]
    f32 = jnp.float32

    # ---- fused task-query gather: one-hot @ lane-tiled queries (MXU) ----
    task = task_ref[...]                                               # (K, 1) int32
    onehot = (task == jax.lax.broadcasted_iota(jnp.int32, (K, num_tasks), 1)
              ).astype(f32)                                            # (K, T)
    q = jnp.dot(onehot, tq_ref[...], preferred_element_type=f32)       # (K, EH): q tiled E times

    # ---- all E expert MLPs as lane-packed GEMMs ----
    x = x_ref[...]                                                     # (K, D)
    h1 = jnp.maximum(
        jnp.dot(x, w1_ref[...], preferred_element_type=f32) + b1_ref[...], 0.0)
    h2 = jnp.maximum(
        jnp.dot(h1, w2_ref[...], preferred_element_type=f32) + b2_ref[...], 0.0)
    # key + value projections fused into one (EH, 2*EH) GEMM; split at the 128-lane
    # tile boundary (static, free).
    kv = jnp.dot(h2, kv_ref[...], preferred_element_type=f32)          # (K, 2*EH)
    keys = kv[:, :EH]                                                  # (K, EH)
    vals = kv[:, EH:]                                                  # (K, EH)

    # ---- static chunk-indicator matrices (trace-time constants, tiny) ----
    # S  (EH, E): S[i, e]  = 1 iff lane i is in expert chunk e  -> per-expert lane reduce (MXU)
    # ST (E, EH): ST[e, j] = 1 iff lane j is in expert chunk e  -> per-expert lane broadcast (MXU)
    # G  (EH, H): G[e*H+h, h'] = 1 iff h == h'                  -> sum chunks over experts (MXU)
    iS = jax.lax.broadcasted_iota(jnp.int32, (EH, E), 0)
    eS = jax.lax.broadcasted_iota(jnp.int32, (EH, E), 1)
    S = ((iS >= eS * H) & (iS < (eS + 1) * H)).astype(f32)
    eT = jax.lax.broadcasted_iota(jnp.int32, (E, EH), 0)
    jT = jax.lax.broadcasted_iota(jnp.int32, (E, EH), 1)
    ST = ((jT >= eT * H) & (jT < (eT + 1) * H)).astype(f32)
    iG = jax.lax.broadcasted_iota(jnp.int32, (EH, H), 0)
    hG = jax.lax.broadcasted_iota(jnp.int32, (EH, H), 1)
    G = jnp.zeros((EH, H), f32)
    for e in range(E):                                                 # static unroll, E is tiny
        G = G + (iG == hG + e * H).astype(f32)

    # Matmuls that share an RHS are batched by stacking LHS along the sublane axis so the
    # indicator matrix is pushed to the MXU once.  The split back is sublane-aligned when
    # K % 8 == 0; otherwise fall back to separate matmuls (avoids an XLU shuffle).
    fuse = (K % 8 == 0)

    # ---- per-expert lane reductions: attention scores + value sum-of-squares ----
    if fuse:
        red = jnp.dot(jnp.concatenate([keys * q, vals * vals], axis=0), S,
                      preferred_element_type=f32)                      # (2K, E)
        scores, sumsq = red[:K], red[K:]
    else:
        scores = jnp.dot(keys * q, S, preferred_element_type=f32)      # (K, E)
        sumsq = jnp.dot(vals * vals, S, preferred_element_type=f32)    # (K, E)

    # ---- softmax over experts + inverse value norms (EUP rsqrt) ----
    m = jnp.max(scores, axis=-1, keepdims=True)
    ex = jnp.exp(scores - m)
    w = ex / jnp.sum(ex, axis=-1, keepdims=True)                       # (K, E)
    inv_norm = jax.lax.rsqrt(jnp.maximum(sumsq, 1e-24))                # == 1/max(||v||, 1e-12)

    # ---- per-expert lane broadcasts (shared RHS ST) ----
    if fuse:
        br = jnp.dot(jnp.concatenate([w, inv_norm], axis=0), ST,
                     preferred_element_type=f32)                       # (2K, EH)
        w_lane, inv_lane = br[:K], br[K:]
    else:
        w_lane = jnp.dot(w, ST, preferred_element_type=f32)            # (K, EH)
        inv_lane = jnp.dot(inv_norm, ST, preferred_element_type=f32)   # (K, EH)

    nrm = vals * inv_lane                                              # (K, EH) normalized values

    # ---- sum over experts (shared RHS G): tower mix + regularizer sum ----
    if fuse:
        gsum = jnp.dot(jnp.concatenate([w_lane * vals, nrm], axis=0), G,
                       preferred_element_type=f32)                     # (2K, H)
        tower, s_all = gsum[:K], gsum[K:]
    else:
        tower = jnp.dot(w_lane * vals, G, preferred_element_type=f32)  # (K, H)
        s_all = jnp.dot(nrm, G, preferred_element_type=f32)            # (K, H)

    tower_ref[...] = tower

    # ---- cosine-similarity regularizer: sum_{e<f} <n_e, n_f> = 0.5*(||sum n||^2 - sum ||n||^2)
    total = jnp.sum(s_all * s_all, axis=-1, keepdims=True)             # (K, 1)
    diag = jnp.sum(nrm * nrm, axis=-1, keepdims=True)                  # (K, 1)
    upper = 0.5 * (total - diag)
    n_pairs = max(E * (E - 1) // 2, 1)                                 # guard E == 1
    sim = jnp.sum(upper, axis=0, keepdims=True) / float(K * n_pairs)   # (1, 1)

    sumlog = jnp.sum(jnp.log(w + 1e-6), axis=-1, keepdims=True)        # (K, 1)
    reg_ref[...] = -(mu / E) * sumlog + mu * sim                       # (K, 1)


# --------------------------------------------------------------------------
# One-time parameter repacking (done at load time, not per forward call).
# --------------------------------------------------------------------------
def pack_moe_params(params):
    W1, b1, W2, b2, Km, Vm, tq = (
        params["W1"], params["b1"], params["W2"], params["b2"],
        params["Km"], params["Vm"], params["task_queries"])
    E, D, H = W1.shape
    EH = E * H
    km_bd = jax.scipy.linalg.block_diag(*Km)                   # (EH, EH)
    vm_bd = jax.scipy.linalg.block_diag(*Vm)                   # (EH, EH)
    packed = {
        "W1p": jnp.transpose(W1, (1, 0, 2)).reshape(D, EH),    # [d, e*H+h] = W1[e, d, h]
        "b1p": b1.reshape(1, EH),
        "W2bd": jax.scipy.linalg.block_diag(*W2),              # (EH, EH) block-diagonal
        "b2p": b2.reshape(1, EH),
        "KVbd": jnp.concatenate([km_bd, vm_bd], axis=1),       # (EH, 2*EH) fused key|value
        "tqt": jnp.tile(tq, (1, E)),                           # (num_tasks, EH)
    }
    return packed, (E, D, H)


# --------------------------------------------------------------------------
# Forward wrapper: exactly one pallas_call, no grid, no HBM intermediates.
# --------------------------------------------------------------------------
def moe_forward(backbone_output, task, packed, dims, mu=0.01):
    E, D, H = dims
    K = backbone_output.shape[0]
    tower, reg = pl.pallas_call(
        functools.partial(moe_kernel, num_experts=E, hidden=H, mu=mu),
        out_shape=(jax.ShapeDtypeStruct((K, H), jnp.float32),
                   jax.ShapeDtypeStruct((K, 1), jnp.float32)),
    )(task.reshape(K, 1).astype(jnp.int32),
      backbone_output.astype(jnp.float32),
      packed["W1p"], packed["b1p"], packed["W2bd"], packed["b2p"],
      packed["KVbd"], packed["tqt"])
    return tower, reg.reshape(K)


# --------------------------------------------------------------------------
# Pure-JAX reference (mirrors the PyTorch forward exactly)
# --------------------------------------------------------------------------
def moe_reference(x, task, params, mu=0.01):
    W1, b1, W2, b2, Km, Vm, tq = (
        params["W1"], params["b1"], params["W2"], params["b2"],
        params["Km"], params["Vm"], params["task_queries"])
    E = W1.shape[0]
    K = x.shape[0]
    outs = []
    for e in range(E):
        h1 = jax.nn.relu(x @ W1[e] + b1[e])
        h2 = jax.nn.relu(h1 @ W2[e] + b2[e])
        outs.append(h2)
    expert_outputs = jnp.stack(outs, axis=1)                        # (K, E, H)
    expert_keys = jnp.einsum("kli,lij->klj", expert_outputs, Km)
    expert_values = jnp.einsum("kli,lij->klj", expert_outputs, Vm)

    nrm = expert_values / jnp.maximum(
        jnp.linalg.norm(expert_values, axis=-1, keepdims=True), 1e-12)
    sim_matrix = jnp.einsum("kei,kfi->kef", nrm, nrm)
    mask = jnp.triu(jnp.ones((E, E), dtype=bool), k=1)
    n_pairs = E * (E - 1) // 2
    sim = jnp.sum(sim_matrix * mask[None]) / (K * n_pairs)

    q = tq[task]
    scores = jnp.einsum("kni,ki->kn", expert_keys, q)
    w = jax.nn.softmax(scores, axis=-1)
    tower = jnp.einsum("kn,kni->ki", w, expert_values)
    reg = -(1.0 / E) * mu * jnp.sum(jnp.log(w + 1e-6), axis=-1) + mu * sim
    return tower, reg


if __name__ == "__main__":
    # module config: input_dim=32, hidden_size=32, num_tasks=10, num_experts=3
    # plus 1 task-specific expert group -> E = 4 total experts, batch K = 8.
    # TODO(synk): create_task_expert_masks / task_expert_masks are defined but never used
    # in the reference forward, so they are not translated.
    D, H, NUM_TASKS = 32, 32, 10
    E = 3 + 1
    K = 8
    MU = 0.01

    key = jax.random.PRNGKey(0)
    ks = jax.random.split(key, 9)
    params = {
        "W1": jax.random.normal(ks[0], (E, D, H), jnp.float32) * 0.1,
        "b1": jax.random.normal(ks[1], (E, H), jnp.float32) * 0.1,
        "W2": jax.random.normal(ks[2], (E, H, H), jnp.float32) * 0.1,
        "b2": jax.random.normal(ks[3], (E, H), jnp.float32) * 0.1,
        "Km": jax.random.normal(ks[4], (E, H, H), jnp.float32) * 0.1,
        "Vm": jax.random.normal(ks[5], (E, H, H), jnp.float32) * 0.1,
        "task_queries": jax.random.normal(ks[6], (NUM_TASKS, H), jnp.float32),
    }
    backbone_output = jax.random.normal(ks[7], (K, D), jnp.float32)
    task = jax.random.randint(ks[8], (K,), 0, NUM_TASKS)

    packed, dims = pack_moe_params(params)
    tower, reg = moe_forward(backbone_output, task, packed, dims, mu=MU)
    tower = jax.block_until_ready(tower)
    reg = jax.block_until_ready(reg)

    tower_ref, reg_ref = moe_reference(backbone_output, task, params, mu=MU)
    assert tower.shape == (K, H) and reg.shape == (K,)
    assert jnp.allclose(tower, tower_ref, rtol=1e-3, atol=1e-3), "tower mismatch"
    assert jnp.allclose(reg, reg_ref, rtol=1e-3, atol=1e-3), "reg mismatch"

    print("KERNEL_OK")
</pallas_src>

<mosaic_0001>
module attributes {stable_mosaic.version = 11 : i64} {
  func.func @moe_kernel(%arg0: memref<8x1xi32, #tpu.memory_space<vmem>>, %arg1: memref<8x32xf32, #tpu.memory_space<vmem>>, %arg2: memref<32x128xf32, #tpu.memory_space<vmem>>, %arg3: memref<1x128xf32, #tpu.memory_space<vmem>>, %arg4: memref<128x128xf32, #tpu.memory_space<vmem>>, %arg5: memref<1x128xf32, #tpu.memory_space<vmem>>, %arg6: memref<128x256xf32, #tpu.memory_space<vmem>>, %arg7: memref<10x128xf32, #tpu.memory_space<vmem>>, %arg8: memref<8x32xf32, #tpu.memory_space<vmem>>, %arg9: memref<8x1xf32, #tpu.memory_space<vmem>>) attributes {dimension_semantics = [], scalar_prefetch = 0 : i64, scratch_operands = 0 : i64, tpu.core_type = #tpu.core_type<tc>} {
    %c0 = arith.constant 0 : index
    %c0_0 = arith.constant 0 : index
    %0 = vector.load %arg0[%c0, %c0_0] : memref<8x1xi32, #tpu.memory_space<vmem>>, vector<8x1xi32>
    %1 = tpu.iota {dimensions = array<i32: 1>} : vector<8x10xi32>
    %2 = vector.broadcast %0 : vector<8x1xi32> to vector<8x10xi32>
    %3 = arith.cmpi eq, %2, %1 : vector<8x10xi32>
    %4 = arith.extui %3 : vector<8x10xi1> to vector<8x10xi32>
    %5 = arith.sitofp %4 : vector<8x10xi32> to vector<8x10xf32>
    %c0_1 = arith.constant 0 : index
    %c0_2 = arith.constant 0 : index
    %6 = vector.load %arg7[%c0_1, %c0_2] : memref<10x128xf32, #tpu.memory_space<vmem>>, vector<10x128xf32>
    %cst = arith.constant dense<0.000000e+00> : vector<8x128xf32>
    %7 = tpu.matmul %5, %6, %cst {dimension_numbers = #tpu.dot_dimension_numbers<[1], [0], [0], [1], [0, 0, 1, 1], [], []>} : vector<8x10xf32>, vector<10x128xf32>, vector<8x128xf32> -> vector<8x128xf32>
    %c0_3 = arith.constant 0 : index
    %c0_4 = arith.constant 0 : index
    %8 = vector.load %arg1[%c0_3, %c0_4] : memref<8x32xf32, #tpu.memory_space<vmem>>, vector<8x32xf32>
    %c0_5 = arith.constant 0 : index
    %c0_6 = arith.constant 0 : index
    %9 = vector.load %arg2[%c0_5, %c0_6] : memref<32x128xf32, #tpu.memory_space<vmem>>, vector<32x128xf32>
    %cst_7 = arith.constant dense<0.000000e+00> : vector<8x128xf32>
    %10 = tpu.matmul %8, %9, %cst_7 {dimension_numbers = #tpu.dot_dimension_numbers<[1], [0], [0], [1], [0, 0, 1, 1], [], []>} : vector<8x32xf32>, vector<32x128xf32>, vector<8x128xf32> -> vector<8x128xf32>
    %c0_8 = arith.constant 0 : index
    %c0_9 = arith.constant 0 : index
    %11 = vector.load %arg3[%c0_8, %c0_9] : memref<1x128xf32, #tpu.memory_space<vmem>>, vector<1x128xf32>
    %12 = vector.broadcast %11 : vector<1x128xf32> to vector<8x128xf32>
    %13 = arith.addf %10, %12 : vector<8x128xf32>
    %cst_10 = arith.constant 0.000000e+00 : f32
    %14 = vector.broadcast %cst_10 : f32 to vector<8x128xf32>
    %15 = arith.maximumf %13, %14 : vector<8x128xf32>
    %c0_11 = arith.constant 0 : index
    %c0_12 = arith.constant 0 : index
    %16 = vector.load %arg4[%c0_11, %c0_12] : memref<128x128xf32, #tpu.memory_space<vmem>>, vector<128x128xf32>
    %cst_13 = arith.constant dense<0.000000e+00> : vector<8x128xf32>
    %17 = tpu.matmul %15, %16, %cst_13 {dimension_numbers = #tpu.dot_dimension_numbers<[1], [0], [0], [1], [0, 0, 1, 1], [], []>} : vector<8x128xf32>, vector<128x128xf32>, vector<8x128xf32> -> vector<8x128xf32>
    %c0_14 = arith.constant 0 : index
    %c0_15 = arith.constant 0 : index
    %18 = vector.load %arg5[%c0_14, %c0_15] : memref<1x128xf32, #tpu.memory_space<vmem>>, vector<1x128xf32>
    %19 = vector.broadcast %18 : vector<1x128xf32> to vector<8x128xf32>
    %20 = arith.addf %17, %19 : vector<8x128xf32>
    %cst_16 = arith.constant 0.000000e+00 : f32
    %21 = vector.broadcast %cst_16 : f32 to vector<8x128xf32>
    %22 = arith.maximumf %20, %21 : vector<8x128xf32>
    %c0_17 = arith.constant 0 : index
    %c0_18 = arith.constant 0 : index
    %23 = vector.load %arg6[%c0_17, %c0_18] : memref<128x256xf32, #tpu.memory_space<vmem>>, vector<128x256xf32>
    %cst_19 = arith.constant dense<0.000000e+00> : vector<8x256xf32>
    %24 = tpu.matmul %22, %23, %cst_19 {dimension_numbers = #tpu.dot_dimension_numbers<[1], [0], [0], [1], [0, 0, 1, 1], [], []>} : vector<8x128xf32>, vector<128x256xf32>, vector<8x256xf32> -> vector<8x256xf32>
    %25 = vector.extract_strided_slice %24 {offsets = [0, 0], sizes = [8, 128], strides = [1, 1]} : vector<8x256xf32> to vector<8x128xf32>
    %26 = vector.extract_strided_slice %24 {offsets = [0, 128], sizes = [8, 128], strides = [1, 1]} : vector<8x256xf32> to vector<8x128xf32>
    %27 = tpu.iota {dimensions = array<i32: 0>} : vector<128x4xi32>
    %28 = tpu.iota {dimensions = array<i32: 1>} : vector<128x4xi32>
    %c32_i32 = arith.constant 32 : i32
    %29 = vector.broadcast %c32_i32 : i32 to vector<128x4xi32>
    %30 = arith.muli %28, %29 : vector<128x4xi32>
    %31 = arith.cmpi sge, %27, %30 : vector<128x4xi32>
    %c1_i32 = arith.constant 1 : i32
    %32 = vector.broadcast %c1_i32 : i32 to vector<128x4xi32>
    %33 = arith.addi %28, %32 : vector<128x4xi32>
    %c32_i32_20 = arith.constant 32 : i32
    %34 = vector.broadcast %c32_i32_20 : i32 to vector<128x4xi32>
    %35 = arith.muli %33, %34 : vector<128x4xi32>
    %36 = arith.cmpi slt, %27, %35 : vector<128x4xi32>
    %37 = arith.andi %31, %36 : vector<128x4xi1>
    %38 = arith.extui %37 : vector<128x4xi1> to vector<128x4xi32>
    %39 = arith.sitofp %38 : vector<128x4xi32> to vector<128x4xf32>
    %40 = tpu.iota {dimensions = array<i32: 0>} : vector<4x128xi32>
    %41 = tpu.iota {dimensions = array<i32: 1>} : vector<4x128xi32>
    %c32_i32_21 = arith.constant 32 : i32
    %42 = vector.broadcast %c32_i32_21 : i32 to vector<4x128xi32>
    %43 = arith.muli %40, %42 : vector<4x128xi32>
    %44 = arith.cmpi sge, %41, %43 : vector<4x128xi32>
    %c1_i32_22 = arith.constant 1 : i32
    %45 = vector.broadcast %c1_i32_22 : i32 to vector<4x128xi32>
    %46 = arith.addi %40, %45 : vector<4x128xi32>
    %c32_i32_23 = arith.constant 32 : i32
    %47 = vector.broadcast %c32_i32_23 : i32 to vector<4x128xi32>
    %48 = arith.muli %46, %47 : vector<4x128xi32>
    %49 = arith.cmpi slt, %41, %48 : vector<4x128xi32>
    %50 = arith.andi %44, %49 : vector<4x128xi1>
    %51 = arith.extui %50 : vector<4x128xi1> to vector<4x128xi32>
    %52 = arith.sitofp %51 : vector<4x128xi32> to vector<4x128xf32>
    %53 = tpu.iota {dimensions = array<i32: 0>} : vector<128x32xi32>
    %54 = tpu.iota {dimensions = array<i32: 1>} : vector<128x32xi32>
    %cst_24 = arith.constant 0.000000e+00 : f32
    %55 = vector.broadcast %cst_24 : f32 to vector<128x32xf32>
    %c0_i32 = arith.constant 0 : i32
    %56 = vector.broadcast %c0_i32 : i32 to vector<128x32xi32>
    %57 = arith.addi %54, %56 : vector<128x32xi32>
    %58 = arith.cmpi eq, %53, %57 : vector<128x32xi32>
    %59 = arith.extui %58 : vector<128x32xi1> to vector<128x32xi32>
    %60 = arith.sitofp %59 : vector<128x32xi32> to vector<128x32xf32>
    %61 = arith.addf %55, %60 : vector<128x32xf32>
    %c32_i32_25 = arith.constant 32 : i32
    %62 = vector.broadcast %c32_i32_25 : i32 to vector<128x32xi32>
    %63 = arith.addi %54, %62 : vector<128x32xi32>
    %64 = arith.cmpi eq, %53, %63 : vector<128x32xi32>
    %65 = arith.extui %64 : vector<128x32xi1> to vector<128x32xi32>
    %66 = arith.sitofp %65 : vector<128x32xi32> to vector<128x32xf32>
    %67 = arith.addf %61, %66 : vector<128x32xf32>
    %c64_i32 = arith.constant 64 : i32
    %68 = vector.broadcast %c64_i32 : i32 to vector<128x32xi32>
    %69 = arith.addi %54, %68 : vector<128x32xi32>
    %70 = arith.cmpi eq, %53, %69 : vector<128x32xi32>
    %71 = arith.extui %70 : vector<128x32xi1> to vector<128x32xi32>
    %72 = arith.sitofp %71 : vector<128x32xi32> to vector<128x32xf32>
    %73 = arith.addf %67, %72 : vector<128x32xf32>
    %c96_i32 = arith.constant 96 : i32
    %74 = vector.broadcast %c96_i32 : i32 to vector<128x32xi32>
    %75 = arith.addi %54, %74 : vector<128x32xi32>
    %76 = arith.cmpi eq, %53, %75 : vector<128x32xi32>
    %77 = arith.extui %76 : vector<128x32xi1> to vector<128x32xi32>
    %78 = arith.sitofp %77 : vector<128x32xi32> to vector<128x32xf32>
    %79 = arith.addf %73, %78 : vector<128x32xf32>
    %80 = arith.mulf %25, %7 : vector<8x128xf32>
    %81 = arith.mulf %26, %26 : vector<8x128xf32>
    %82 = tpu.concatenate %80, %81 in 0 : vector<8x128xf32>, vector<8x128xf32> -> vector<16x128xf32>
    %cst_26 = arith.constant dense<0.000000e+00> : vector<16x4xf32>
    %83 = tpu.matmul %82, %39, %cst_26 {dimension_numbers = #tpu.dot_dimension_numbers<[1], [0], [0], [1], [0, 0, 1, 1], [], []>} : vector<16x128xf32>, vector<128x4xf32>, vector<16x4xf32> -> vector<16x4xf32>
    %84 = vector.extract_strided_slice %83 {offsets = [0, 0], sizes = [8, 4], strides = [1, 1]} : vector<16x4xf32> to vector<8x4xf32>
    %85 = vector.extract_strided_slice %83 {offsets = [8, 0], sizes = [8, 4], strides = [1, 1]} : vector<16x4xf32> to vector<8x4xf32>
    %cst_27 = arith.constant dense<0xFF800000> : vector<8xf32>
    %86 = vector.multi_reduction <maximumf>, %84, %cst_27 [1] : vector<8x4xf32> to vector<8xf32>
    %87 = vector.shape_cast %86 : vector<8xf32> to vector<8x1xf32>
    %88 = vector.broadcast %87 : vector<8x1xf32> to vector<8x4xf32>
    %89 = arith.subf %84, %88 : vector<8x4xf32>
    %90 = math.exp %89 : vector<8x4xf32>
    %cst_28 = arith.constant dense<0.000000e+00> : vector<8xf32>
    %91 = vector.multi_reduction <add>, %90, %cst_28 [1] : vector<8x4xf32> to vector<8xf32>
    %92 = vector.shape_cast %91 : vector<8xf32> to vector<8x1xf32>
    %93 = vector.broadcast %92 : vector<8x1xf32> to vector<8x4xf32>
    %94 = arith.divf %90, %93 : vector<8x4xf32>
    %cst_29 = arith.constant 1.000000e-24 : f32
    %95 = vector.broadcast %cst_29 : f32 to vector<8x4xf32>
    %96 = arith.maximumf %85, %95 : vector<8x4xf32>
    %97 = math.rsqrt %96 : vector<8x4xf32>
    %98 = tpu.concatenate %94, %97 in 0 : vector<8x4xf32>, vector<8x4xf32> -> vector<16x4xf32>
    %cst_30 = arith.constant dense<0.000000e+00> : vector<16x128xf32>
    %99 = tpu.matmul %98, %52, %cst_30 {dimension_numbers = #tpu.dot_dimension_numbers<[1], [0], [0], [1], [0, 0, 1, 1], [], []>} : vector<16x4xf32>, vector<4x128xf32>, vector<16x128xf32> -> vector<16x128xf32>
    %100 = vector.extract_strided_slice %99 {offsets = [0, 0], sizes = [8, 128], strides = [1, 1]} : vector<16x128xf32> to vector<8x128xf32>
    %101 = vector.extract_strided_slice %99 {offsets = [8, 0], sizes = [8, 128], strides = [1, 1]} : vector<16x128xf32> to vector<8x128xf32>
    %102 = arith.mulf %26, %101 : vector<8x128xf32>
    %103 = arith.mulf %100, %26 : vector<8x128xf32>
    %104 = tpu.concatenate %103, %102 in 0 : vector<8x128xf32>, vector<8x128xf32> -> vector<16x128xf32>
    %cst_31 = arith.constant dense<0.000000e+00> : vector<16x32xf32>
    %105 = tpu.matmul %104, %79, %cst_31 {dimension_numbers = #tpu.dot_dimension_numbers<[1], [0], [0], [1], [0, 0, 1, 1], [], []>} : vector<16x128xf32>, vector<128x32xf32>, vector<16x32xf32> -> vector<16x32xf32>
    %106 = vector.extract_strided_slice %105 {offsets = [0, 0], sizes = [8, 32], strides = [1, 1]} : vector<16x32xf32> to vector<8x32xf32>
    %107 = vector.extract_strided_slice %105 {offsets = [8, 0], sizes = [8, 32], strides = [1, 1]} : vector<16x32xf32> to vector<8x32xf32>
    %c0_32 = arith.constant 0 : index
    %c0_33 = arith.constant 0 : index
    %108 = vector.load %arg8[%c0_32, %c0_33] : memref<8x32xf32, #tpu.memory_space<vmem>>, vector<8x32xf32>
    tpu.vector_store %arg8[%c0_32, %c0_33], %106 {strides = array<i32>} : memref<8x32xf32, #tpu.memory_space<vmem>>, vector<8x32xf32>,
    %109 = arith.mulf %107, %107 : vector<8x32xf32>
    %cst_34 = arith.constant dense<0.000000e+00> : vector<8xf32>
    %110 = vector.multi_reduction <add>, %109, %cst_34 [1] : vector<8x32xf32> to vector<8xf32>
    %111 = vector.shape_cast %110 : vector<8xf32> to vector<8x1xf32>
    %112 = arith.mulf %102, %102 : vector<8x128xf32>
    %cst_35 = arith.constant dense<0.000000e+00> : vector<8xf32>
    %113 = vector.multi_reduction <add>, %112, %cst_35 [1] : vector<8x128xf32> to vector<8xf32>
    %114 = vector.shape_cast %113 : vector<8xf32> to vector<8x1xf32>
    %115 = arith.subf %111, %114 : vector<8x1xf32>
    %cst_36 = arith.constant 5.000000e-01 : f32
    %116 = vector.broadcast %cst_36 : f32 to vector<8x1xf32>
    %117 = arith.mulf %116, %115 : vector<8x1xf32>
    %cst_37 = arith.constant dense<0.000000e+00> : vector<1xf32>
    %118 = vector.multi_reduction <add>, %117, %cst_37 [0] : vector<8x1xf32> to vector<1xf32>
    %119 = vector.shape_cast %118 : vector<1xf32> to vector<1x1xf32>
    %cst_38 = arith.constant 4.800000e+01 : f32
    %120 = vector.broadcast %cst_38 : f32 to vector<1x1xf32>
    %121 = arith.divf %119, %120 : vector<1x1xf32>
    %cst_39 = arith.constant 9.99999997E-7 : f32
    %122 = vector.broadcast %cst_39 : f32 to vector<8x4xf32>
    %123 = arith.addf %94, %122 : vector<8x4xf32>
    %124 = math.log %123 : vector<8x4xf32>
    %cst_40 = arith.constant dense<0.000000e+00> : vector<8xf32>
    %125 = vector.multi_reduction <add>, %124, %cst_40 [1] : vector<8x4xf32> to vector<8xf32>
    %126 = vector.shape_cast %125 : vector<8xf32> to vector<8x1xf32>
    %cst_41 = arith.constant -2.500000e-03 : f32
    %127 = vector.broadcast %cst_41 : f32 to vector<8x1xf32>
    %128 = arith.mulf %127, %126 : vector<8x1xf32>
    %cst_42 = arith.constant 0.00999999977 : f32
    %129 = vector.broadcast %cst_42 : f32 to vector<1x1xf32>
    %130 = arith.mulf %129, %121 : vector<1x1xf32>
    %131 = vector.broadcast %130 : vector<1x1xf32> to vector<8x1xf32>
    %132 = arith.addf %128, %131 : vector<8x1xf32>
    %c0_43 = arith.constant 0 : index
    %c0_44 = arith.constant 0 : index
    %133 = vector.load %arg9[%c0_43, %c0_44] : memref<8x1xf32, #tpu.memory_space<vmem>>, vector<8x1xf32>
    tpu.vector_store %arg9[%c0_43, %c0_44], %132 {strides = array<i32>} : memref<8x1xf32, #tpu.memory_space<vmem>>, vector<8x1xf32>,
    return
  }
}

</mosaic_0001>

<llo_original>
// kernel: tpu_custom_call.1
$region0: #{tpu_custom_call.1}
  #allocation0 [shape = 'u32[]', space=smem, size = 0x4, offset = 0x4, fixed_abs, tag = 'smem constant byte address 0x4 - core index']
  #allocation1 [shape = 'u32[144,128]{1,0:T(1,128)}', space=vmem, size = 0x12000, scoped, tag = 'internal scratch']
  %s0 = inlined_call_operand.vmem [shape: s32[8,1], index: 0, kind: input, shape index: {}]
  %s1 = inlined_call_operand.hbm [shape: f32[8,32], index: 1, kind: input, shape index: {}]
  %s2 = inlined_call_operand.hbm [shape: f32[32,128], index: 2, kind: input, shape index: {}]
  %s3 = inlined_call_operand.vmem [shape: f32[1,128], index: 3, kind: input, shape index: {}]
  %s4 = inlined_call_operand.hbm [shape: f32[128,128], index: 4, kind: input, shape index: {}]
  %s5 = inlined_call_operand.vmem [shape: f32[1,128], index: 5, kind: input, shape index: {}]
  %s6 = inlined_call_operand.hbm [shape: f32[128,256], index: 6, kind: input, shape index: {}]
  %s7 = inlined_call_operand.vmem [shape: f32[10,128], index: 7, kind: input, shape index: {}]
  %s8 = inlined_call_operand.hbm [shape: f32[8,32], index: 8, kind: output, shape index: {0}]
  %s9 = inlined_call_operand.vmem [shape: f32[8,1], index: 9, kind: output, shape index: {1}]
  %10 = xla_tuple %s8, %s9
  %s11 = sld [smem:[#allocation0]]
  $region66: #{tpu_custom_call.1} parent=0
    _
  %s13 = ssub.s32 1, %s11
  %s14 = scalar_select 0, %s13, %s11
  $region1: #{tpu_custom_call.1} parent=0
    #allocation2 [shape = 'u8[4096]{0}', space=vmem, size = 0x1000, scoped, tag = 'input window, operand 1, single buffered']
    #allocation3 [shape = 's32[1]{0}', space=sflag, size = 0x4, scoped, tag = 'scoped memory for tpu_custom_call.1']
    #allocation4 [shape = 's32[1]{0}', space=sflag, size = 0x4, scoped, tag = 'scoped memory for tpu_custom_call.1']
    #allocation5 [shape = 'u8[16384]{0}', space=vmem, size = 0x4000, scoped, tag = 'input window, operand 2, single buffered']
    #allocation6 [shape = 's32[1]{0}', space=sflag, size = 0x4, scoped, tag = 'scoped memory for tpu_custom_call.1']
    #allocation7 [shape = 'u8[65536]{0}', space=vmem, size = 0x10000, scoped, tag = 'input window, operand 4, single buffered']
    #allocation8 [shape = 'u8[131072]{0}', space=vmem, size = 0x20000, scoped, tag = 'input window, operand 6, single buffered']
    #allocation9 [shape = 's32[1]{0}', space=sflag, size = 0x4, scoped, tag = 'scoped memory for tpu_custom_call.1']
    #allocation10 [shape = 'u8[4096]{0}', space=vmem, size = 0x1000, scoped, tag = 'output window, operand 0, single buffered']
    %15 = vsyncpa [#allocation3], 0
    %16 = vsyncpa [#allocation6], 0
    %17 = vsyncpa [#allocation9], 0
    %18 = vsyncpa [#allocation4], 0
    // Predicated region
    $region2: #{tpu_custom_call.1} parent=1 // pred_check
      _
    $region3: #{tpu_custom_call.1} parent=1 // pred_check_branch
      %20 = sbr.rel (0) target = $region5
    $region4: #{tpu_custom_call.1} parent=1 // pred_region
      _
    $region5: #{tpu_custom_call.1} parent=1 // pred_fallthru
      _
    // Predicated region
    $region6: #{tpu_custom_call.1} parent=1 // pred_check
      _
    $region7: #{tpu_custom_call.1} parent=1 // pred_check_branch
      %22 = sbr.rel (0) target = $region9
    $region8: #{tpu_custom_call.1} parent=1 // pred_region
      %s24 = ssub.s32 128, 128
      %25 = vsyncadd [#allocation3], %s24
      %s27 = sshll.u32 [#allocation2], 4
      %s28 = int_to_ptr.vmem [resolvable:$true] %s27
      %30 = dma.hbm_to_vmem [thread:$0]  %s1, 128, %s28, [#allocation3]
    $region9: #{tpu_custom_call.1} parent=1 // pred_fallthru
      _
    // Predicated region
    $region10: #{tpu_custom_call.1} parent=1 // pred_check
      _
    $region11: #{tpu_custom_call.1} parent=1 // pred_check_branch
      %32 = sbr.rel (0) target = $region13
    $region12: #{tpu_custom_call.1} parent=1 // pred_region
      %s34 = ssub.s32 512, 512
      %35 = vsyncadd [#allocation6], %s34
      %s36 = sshll.u32 [#allocation5], 4
      %s37 = int_to_ptr.vmem [resolvable:$true] %s36
      %42 = dma.hbm_to_vmem [thread:$0]  %s2, 512, %s37, [#allocation6], 128, 128, 8
    $region13: #{tpu_custom_call.1} parent=1 // pred_fallthru
      _
    // Predicated region
    $region14: #{tpu_custom_call.1} parent=1 // pred_check
      _
    $region15: #{tpu_custom_call.1} parent=1 // pred_check_branch
      %44 = sbr.rel (0) target = $region17
    $region16: #{tpu_custom_call.1} parent=1 // pred_region
      _
    $region17: #{tpu_custom_call.1} parent=1 // pred_fallthru
      _
    // Predicated region
    $region18: #{tpu_custom_call.1} parent=1 // pred_check
      _
    $region19: #{tpu_custom_call.1} parent=1 // pred_check_branch
      %46 = sbr.rel (0) target = $region21
    $region20: #{tpu_custom_call.1} parent=1 // pred_region
      %s48 = ssub.s32 2048, 2048
      %49 = vsyncadd [#allocation6], %s48
      %s50 = sshll.u32 [#allocation7], 4
      %s51 = int_to_ptr.vmem [resolvable:$true] %s50
      %56 = dma.hbm_to_vmem [thread:$0]  %s4, 2048, %s51, [#allocation6], 128, 128, 8
    $region21: #{tpu_custom_call.1} parent=1 // pred_fallthru
      _
    // Predicated region
    $region22: #{tpu_custom_call.1} parent=1 // pred_check
      _
    $region23: #{tpu_custom_call.1} parent=1 // pred_check_branch
      %58 = sbr.rel (0) target = $region25
    $region24: #{tpu_custom_call.1} parent=1 // pred_region
      _
    $region25: #{tpu_custom_call.1} parent=1 // pred_fallthru
      _
    // Predicated region
    $region26: #{tpu_custom_call.1} parent=1 // pred_check
      _
    $region27: #{tpu_custom_call.1} parent=1 // pred_check_branch
      %60 = sbr.rel (0) target = $region29
    $region28: #{tpu_custom_call.1} parent=1 // pred_region
      %s62 = ssub.s32 4096, 4096
      %63 = vsyncadd [#allocation9], %s62
      %s64 = sshll.u32 [#allocation8], 4
      %s65 = int_to_ptr.vmem [resolvable:$true] %s64
      %70 = dma.hbm_to_vmem [thread:$0]  %s6, 4096, %s65, [#allocation9], 256, 256, 16
    $region29: #{tpu_custom_call.1} parent=1 // pred_fallthru
      _
    // Predicated region
    $region30: #{tpu_custom_call.1} parent=1 // pred_check
      _
    $region31: #{tpu_custom_call.1} parent=1 // pred_check_branch
      %72 = sbr.rel (0) target = $region33
    $region32: #{tpu_custom_call.1} parent=1 // pred_region
      _
    $region33: #{tpu_custom_call.1} parent=1 // pred_fallthru
      _
    // Predicated region
    $region34: #{tpu_custom_call.1} parent=1 // pred_check
      _
    $region35: #{tpu_custom_call.1} parent=1 // pred_check_branch
      %74 = sbr.rel (0) target = $region37
    $region36: #{tpu_custom_call.1} parent=1 // pred_region
      %75 = dma.done [#allocation3], 128
    $region37: #{tpu_custom_call.1} parent=1 // pred_fallthru
      _
    // Predicated region
    $region38: #{tpu_custom_call.1} parent=1 // pred_check
      _
    $region39: #{tpu_custom_call.1} parent=1 // pred_check_branch
      %77 = sbr.rel (0) target = $region41
    $region40: #{tpu_custom_call.1} parent=1 // pred_region
      %78 = dma.done [#allocation6], 512
    $region41: #{tpu_custom_call.1} parent=1 // pred_fallthru
      _
    // Predicated region
    $region42: #{tpu_custom_call.1} parent=1 // pred_check
      _
    $region43: #{tpu_custom_call.1} parent=1 // pred_check_branch
      %80 = sbr.rel (0) target = $region45
    $region44: #{tpu_custom_call.1} parent=1 // pred_region
      %81 = dma.done [#allocation6], 2048
    $region45: #{tpu_custom_call.1} parent=1 // pred_fallthru
      _
    // Predicated region
    $region46: #{tpu_custom_call.1} parent=1 // pred_check
      _
    $region47: #{tpu_custom_call.1} parent=1 // pred_check_branch
      %83 = sbr.rel (0) target = $region49
    $region48: #{tpu_custom_call.1} parent=1 // pred_region
      %84 = dma.done [#allocation9], 4096
    $region49: #{tpu_custom_call.1} parent=1 // pred_fallthru
      _
    %v85 = vld [vmem:[%s0] sm:$0xff]
    %v86 = vlaneseq
    %v87 = vand.u32 %v86, 127
    %88 = vset.pattern.permute.xlu0 0
    %89 = vperm.xlu0 %88, %v85
    %v90 = vpop.permute.xlu0 %89
    %vm91 = vcmp.eq.s32.totalorder %v90, %v87
    %v92 = vsel %vm91, 1, 0
    %v93 = vcvt.s32.f32 %v92
    %v94 = vld [vmem:[%s7] sm:$0xff]
    %v95 = vld [vmem:[%s7 + $0x8] sm:$0x3]
    %vm96 = vcmask 80896
    %v98 = vsel %vm96, %v93, 0
    %vm100 = vcmask 1041408
    %v102 = vsel %vm100, %v95, 0
    %104 = vmatprep.subr.mxu0 0.0
    %105 = vmatpush1.msra.mxu0 0.0
    %106 = vmatprep.subr.mxu0 0.0
    %107 = vmatpush1.msra.mxu0 0.0
    %108 = vmatprep.subr.mxu0 0.0
    %109 = vmatpush1.msra.mxu0 0.0
    %110 = vmatprep.subr.mxu0 0.0
    %111 = vmatpush1.msra.mxu0 0.0
    %112 = vmatprep.subr.mxu0 0.0
    %113 = vmatpush1.msra.mxu0 0.0
    %114 = vmatprep.subr.mxu0 0.0
    %115 = vmatpush1.msra.mxu0 0.0
    %116 = vmatprep.subr.mxu0 0.0
    %117 = vmatpush1.msra.mxu0 0.0
    %118 = vmatprep.subr.mxu0 0.0
    %119 = vmatpush1.msra.mxu0 0.0
    %120 = vmatprep.subr.mxu0 0.0
    %121 = vmatpush1.msra.mxu0 0.0
    %122 = vmatprep.subr.mxu0 0.0
    %123 = vmatpush1.msra.mxu0 0.0
    %124 = vmatprep.subr.mxu0 0.0
    %125 = vmatpush1.msra.mxu0 0.0
    %126 = vmatprep.subr.mxu0 0.0
    %127 = vmatpush1.msra.mxu0 0.0
    %128 = vmatprep.subr.mxu0 0.0
    %129 = vmatpush1.msra.mxu0 0.0
    %130 = vmatprep.subr.mxu0 0.0
    %131 = vmatpush1.msra.mxu0 0.0
    %132 = vmatprep.subr.mxu0 0.0
    %133 = vmatpush1.msra.mxu0 %v102
    %134 = vmatprep.subr.mxu0 0.0
    %135 = vmatpush1.msra.mxu0 %v94
    %136 = vmatprep.subr.mxu0 0.0
    %137 = vmatpush2.msra.mxu0 0.0
    %138 = vmatprep.subr.mxu0 0.0
    %139 = vmatpush2.msra.mxu0 0.0
    %140 = vmatprep.subr.mxu0 0.0
    %141 = vmatpush2.msra.mxu0 0.0
    %142 = vmatprep.subr.mxu0 0.0
    %143 = vmatpush2.msra.mxu0 0.0
    %144 = vmatprep.subr.mxu0 0.0
    %145 = vmatpush2.msra.mxu0 0.0
    %146 = vmatprep.subr.mxu0 0.0
    %147 = vmatpush2.msra.mxu0 0.0
    %148 = vmatprep.subr.mxu0 0.0
    %149 = vmatpush2.msra.mxu0 0.0
    %150 = vmatprep.subr.mxu0 0.0
    %151 = vmatpush2.msra.mxu0 0.0
    %152 = vmatprep.subr.mxu0 0.0
    %153 = vmatpush2.msra.mxu0 0.0
    %154 = vmatprep.subr.mxu0 0.0
    %155 = vmatpush2.msra.mxu0 0.0
    %156 = vmatprep.subr.mxu0 0.0
    %157 = vmatpush2.msra.mxu0 0.0
    %158 = vmatprep.subr.mxu0 0.0
    %159 = vmatpush2.msra.mxu0 0.0
    %160 = vmatprep.subr.mxu0 0.0
    %161 = vmatpush2.msra.mxu0 0.0
    %162 = vmatprep.subr.mxu0 0.0
    %163 = vmatpush2.msra.mxu0 0.0
    %164 = vmatprep.subr.mxu0 0.0
    %165 = vmatpush2.msra.mxu0 0.0
    %166 = vmatprep.subr.mxu0 0.0
    %167 = vmatpush2.msra.mxu0 0.0
    %168 = vmatprep.mubr.f32.mxu0 0.0
    %169 = vmatmul.mubr.f32.gmra.mxu0 %v98
    %v170 = vpop.f32.mrf.mxu0
    %v171 = vadd.f32 0.0, %v170
    %v172 = vpop.f32.mrf.mxu0
    %173 = vdwg.mxu0
    %v174 = vld [vmem:[#allocation2] sm:$0xff]
    %v175 = vld [vmem:[#allocation5] sm:$0xff]
    %v176 = vld [vmem:[#allocation5 + $0x8] sm:$0xff]
    %v177 = vld [vmem:[#allocation5 + $0x10] sm:$0xff]
    %v178 = vld [vmem:[#allocation5 + $0x18] sm:$0xff]
    %v179 = vld [vmem:[%s3] sm:$0x1]
    %v181 = vlaneseq
    %v182 = vshrl.u32 %v181, 7
    %v183 = vsub.s32 0, %v182
    %v184 = vrot.slane %v179, %v183
    %vm186 = vcmask 261120
    %v188 = vsel %vm186, %v174, 0
    %190 = vmatprep.subr.mxu0 0.0
    %191 = vmatpush1.msra.mxu0 0.0
    %192 = vmatprep.subr.mxu0 0.0
    %193 = vmatpush1.msra.mxu0 0.0
    %194 = vmatprep.subr.mxu0 0.0
    %195 = vmatpush1.msra.mxu0 0.0
    %196 = vmatprep.subr.mxu0 0.0
    %197 = vmatpush1.msra.mxu0 0.0
    %198 = vmatprep.subr.mxu0 0.0
    %199 = vmatpush1.msra.mxu0 0.0
    %200 = vmatprep.subr.mxu0 0.0
    %201 = vmatpush1.msra.mxu0 0.0
    %202 = vmatprep.subr.mxu0 0.0
    %203 = vmatpush1.msra.mxu0 0.0
    %204 = vmatprep.subr.mxu0 0.0
    %205 = vmatpush1.msra.mxu0 0.0
    %206 = vmatprep.subr.mxu0 0.0
    %207 = vmatpush1.msra.mxu0 0.0
    %208 = vmatprep.subr.mxu0 0.0
    %209 = vmatpush1.msra.mxu0 0.0
    %210 = vmatprep.subr.mxu0 0.0
    %211 = vmatpush1.msra.mxu0 0.0
    %212 = vmatprep.subr.mxu0 0.0
    %213 = vmatpush1.msra.mxu0 0.0
    %214 = vmatprep.subr.mxu0 0.0
    %215 = vmatpush1.msra.mxu0 %v178
    %216 = vmatprep.subr.mxu0 0.0
    %217 = vmatpush1.msra.mxu0 %v177
    %218 = vmatprep.subr.mxu0 0.0
    %219 = vmatpush1.msra.mxu0 %v176
    %220 = vmatprep.subr.mxu0 0.0
    %221 = vmatpush1.msra.mxu0 %v175
    %222 = vmatprep.subr.mxu0 0.0
    %223 = vmatpush2.msra.mxu0 0.0
    %224 = vmatprep.subr.mxu0 0.0
    %225 = vmatpush2.msra.mxu0 0.0
    %226 = vmatprep.subr.mxu0 0.0
    %227 = vmatpush2.msra.mxu0 0.0
    %228 = vmatprep.subr.mxu0 0.0
    %229 = vmatpush2.msra.mxu0 0.0
    %230 = vmatprep.subr.mxu0 0.0
    %231 = vmatpush2.msra.mxu0 0.0
    %232 = vmatprep.subr.mxu0 0.0
    %233 = vmatpush2.msra.mxu0 0.0
    %234 = vmatprep.subr.mxu0 0.0
    %235 = vmatpush2.msra.mxu0 0.0
    %236 = vmatprep.subr.mxu0 0.0
    %237 = vmatpush2.msra.mxu0 0.0
    %238 = vmatprep.subr.mxu0 0.0
    %239 = vmatpush2.msra.mxu0 0.0
    %240 = vmatprep.subr.mxu0 0.0
    %241 = vmatpush2.msra.mxu0 0.0
    %242 = vmatprep.subr.mxu0 0.0
    %243 = vmatpush2.msra.mxu0 0.0
    %244 = vmatprep.subr.mxu0 0.0
    %245 = vmatpush2.msra.mxu0 0.0
    %246 = vmatprep.subr.mxu0 0.0
    %247 = vmatpush2.msra.mxu0 0.0
    %248 = vmatprep.subr.mxu0 0.0
    %249 = vmatpush2.msra.mxu0 0.0
    %250 = vmatprep.subr.mxu0 0.0
    %251 = vmatpush2.msra.mxu0 0.0
    %252 = vmatprep.subr.mxu0 0.0
    %253 = vmatpush2.msra.mxu0 0.0
    %254 = vmatprep.mubr.f32.mxu0 0.0
    %255 = vmatmul.mubr.f32.gmra.mxu0 %v188
    %v256 = vpop.f32.mrf.mxu0
    %v257 = vadd.f32 %v184, %v256
    %v258 = vpop.f32.mrf.mxu0
    %259 = vdwg.mxu0
    %v260 = vmax.f32 %v257, 0.0
    %v261 = vld [vmem:[#allocation7] sm:$0xff]
    %v262 = vld [vmem:[#allocation7 + $0x8] sm:$0xff]
    %v263 = vld [vmem:[#allocation7 + $0x10] sm:$0xff]
    %v264 = vld [vmem:[#allocation7 + $0x18] sm:$0xff]
    %v265 = vld [vmem:[#allocation7 + $0x20] sm:$0xff]
    %v266 = vld [vmem:[#allocation7 + $0x28] sm:$0xff]
    %v267 = vld [vmem:[#allocation7 + $0x30] sm:$0xff]
    %v268 = vld [vmem:[#allocation7 + $0x38] sm:$0xff]
    %v269 = vld [vmem:[#allocation7 + $0x40] sm:$0xff]
    %v270 = vld [vmem:[#allocation7 + $0x48] sm:$0xff]
    %v271 = vld [vmem:[#allocation7 + $0x50] sm:$0xff]
    %v272 = vld [vmem:[#allocation7 + $0x58] sm:$0xff]
    %v273 = vld [vmem:[#allocation7 + $0x60] sm:$0xff]
    %v274 = vld [vmem:[#allocation7 + $0x68] sm:$0xff]
    %v275 = vld [vmem:[#allocation7 + $0x70] sm:$0xff]
    %v276 = vld [vmem:[#allocation7 + $0x78] sm:$0xff]
    %v277 = vld [vmem:[%s5] sm:$0x1]
    %v279 = vlaneseq
    %v280 = vshrl.u32 %v279, 7
    %v281 = vsub.s32 0, %v280
    %v282 = vrot.slane %v277, %v281
    %284 = vmatprep.subr.mxu0 0.0
    %285 = vmatpush1.msra.mxu0 %v276
    %286 = vmatprep.subr.mxu0 0.0
    %287 = vmatpush1.msra.mxu0 %v275
    %288 = vmatprep.subr.mxu0 0.0
    %289 = vmatpush1.msra.mxu0 %v274
    %290 = vmatprep.subr.mxu0 0.0
    %291 = vmatpush1.msra.mxu0 %v273
    %292 = vmatprep.subr.mxu0 0.0
    %293 = vmatpush1.msra.mxu0 %v272
    %294 = vmatprep.subr.mxu0 0.0
    %295 = vmatpush1.msra.mxu0 %v271
    %296 = vmatprep.subr.mxu0 0.0
    %297 = vmatpush1.msra.mxu0 %v270
    %298 = vmatprep.subr.mxu0 0.0
    %299 = vmatpush1.msra.mxu0 %v269
    %300 = vmatprep.subr.mxu0 0.0
    %301 = vmatpush1.msra.mxu0 %v268
    %302 = vmatprep.subr.mxu0 0.0
    %303 = vmatpush1.msra.mxu0 %v267
    %304 = vmatprep.subr.mxu0 0.0
    %305 = vmatpush1.msra.mxu0 %v266
    %306 = vmatprep.subr.mxu0 0.0
    %307 = vmatpush1.msra.mxu0 %v265
    %308 = vmatprep.subr.mxu0 0.0
    %309 = vmatpush1.msra.mxu0 %v264
    %310 = vmatprep.subr.mxu0 0.0
    %311 = vmatpush1.msra.mxu0 %v263
    %312 = vmatprep.subr.mxu0 0.0
    %313 = vmatpush1.msra.mxu0 %v262
    %314 = vmatprep.subr.mxu0 0.0
    %315 = vmatpush1.msra.mxu0 %v261
    %316 = vmatprep.subr.mxu0 0.0
    %317 = vmatpush2.msra.mxu0 0.0
    %318 = vmatprep.subr.mxu0 0.0
    %319 = vmatpush2.msra.mxu0 0.0
    %320 = vmatprep.subr.mxu0 0.0
    %321 = vmatpush2.msra.mxu0 0.0
    %322 = vmatprep.subr.mxu0 0.0
    %323 = vmatpush2.msra.mxu0 0.0
    %324 = vmatprep.subr.mxu0 0.0
    %325 = vmatpush2.msra.mxu0 0.0
    %326 = vmatprep.subr.mxu0 0.0
    %327 = vmatpush2.msra.mxu0 0.0
    %328 = vmatprep.subr.mxu0 0.0
    %329 = vmatpush2.msra.mxu0 0.0
    %330 = vmatprep.subr.mxu0 0.0
    %331 = vmatpush2.msra.mxu0 0.0
    %332 = vmatprep.subr.mxu0 0.0
    %333 = vmatpush2.msra.mxu0 0.0
    %334 = vmatprep.subr.mxu0 0.0
    %335 = vmatpush2.msra.mxu0 0.0
    %336 = vmatprep.subr.mxu0 0.0
    %337 = vmatpush2.msra.mxu0 0.0
    %338 = vmatprep.subr.mxu0 0.0
    %339 = vmatpush2.msra.mxu0 0.0
    %340 = vmatprep.subr.mxu0 0.0
    %341 = vmatpush2.msra.mxu0 0.0
    %342 = vmatprep.subr.mxu0 0.0
    %343 = vmatpush2.msra.mxu0 0.0
    %344 = vmatprep.subr.mxu0 0.0
    %345 = vmatpush2.msra.mxu0 0.0
    %346 = vmatprep.subr.mxu0 0.0
    %347 = vmatpush2.msra.mxu0 0.0
    %348 = vmatprep.mubr.f32.mxu0 0.0
    %349 = vmatmul.mubr.f32.gmra.mxu0 %v260
    %v350 = vpop.f32.mrf.mxu0
    %v351 = vadd.f32 %v282, %v350
    %v352 = vpop.f32.mrf.mxu0
    %353 = vdwg.mxu0
    %v354 = vmax.f32 %v351, 0.0
    %v355 = vld [vmem:[#allocation8] sm:$0xff]
    %v356 = vld [vmem:[#allocation8 + $0x8] sm:$0xff]
    %v357 = vld [vmem:[#allocation8 + $0x10] sm:$0xff]
    %v358 = vld [vmem:[#allocation8 + $0x18] sm:$0xff]
    %v359 = vld [vmem:[#allocation8 + $0x20] sm:$0xff]
    %v360 = vld [vmem:[#allocation8 + $0x28] sm:$0xff]
    %v361 = vld [vmem:[#allocation8 + $0x30] sm:$0xff]
    %v362 = vld [vmem:[#allocation8 + $0x38] sm:$0xff]
    %v363 = vld [vmem:[#allocation8 + $0x40] sm:$0xff]
    %v364 = vld [vmem:[#allocation8 + $0x48] sm:$0xff]
    %v365 = vld [vmem:[#allocation8 + $0x50] sm:$0xff]
    %v366 = vld [vmem:[#allocation8 + $0x58] sm:$0xff]
    %v367 = vld [vmem:[#allocation8 + $0x60] sm:$0xff]
    %v368 = vld [vmem:[#allocation8 + $0x68] sm:$0xff]
    %v369 = vld [vmem:[#allocation8 + $0x70] sm:$0xff]
    %v370 = vld [vmem:[#allocation8 + $0x78] sm:$0xff]
    %v371 = vld [vmem:[#allocation8 + $0x80] sm:$0xff]
    %v372 = vld [vmem:[#allocation8 + $0x88] sm:$0xff]
    %v373 = vld [vmem:[#allocation8 + $0x90] sm:$0xff]
    %v374 = vld [vmem:[#allocation8 + $0x98] sm:$0xff]
    %v375 = vld [vmem:[#allocation8 + $0xa0] sm:$0xff]
    %v376 = vld [vmem:[#allocation8 + $0xa8] sm:$0xff]
    %v377 = vld [vmem:[#allocation8 + $0xb0] sm:$0xff]
    %v378 = vld [vmem:[#allocation8 + $0xb8] sm:$0xff]
    %v379 = vld [vmem:[#allocation8 + $0xc0] sm:$0xff]
    %v380 = vld [vmem:[#allocation8 + $0xc8] sm:$0xff]
    %v381 = vld [vmem:[#allocation8 + $0xd0] sm:$0xff]
    %v382 = vld [vmem:[#allocation8 + $0xd8] sm:$0xff]
    %v383 = vld [vmem:[#allocation8 + $0xe0] sm:$0xff]
    %v384 = vld [vmem:[#allocation8 + $0xe8] sm:$0xff]
    %v385 = vld [vmem:[#allocation8 + $0xf0] sm:$0xff]
    %v386 = vld [vmem:[#allocation8 + $0xf8] sm:$0xff]
    %387 = vmatprep.subr.mxu0 %v386
    %388 = vmatpush1.msra.mxu0 %v385
    %389 = vmatprep.subr.mxu0 %v384
    %390 = vmatpush1.msra.mxu0 %v383
    %391 = vmatprep.subr.mxu0 %v382
    %392 = vmatpush1.msra.mxu0 %v381
    %393 = vmatprep.subr.mxu0 %v380
    %394 = vmatpush1.msra.mxu0 %v379
    %395 = vmatprep.subr.mxu0 %v378
    %396 = vmatpush1.msra.mxu0 %v377
    %397 = vmatprep.subr.mxu0 %v376
    %398 = vmatpush1.msra.mxu0 %v375
    %399 = vmatprep.subr.mxu0 %v374
    %400 = vmatpush1.msra.mxu0 %v373
    %401 = vmatprep.subr.mxu0 %v372
    %402 = vmatpush1.msra.mxu0 %v371
    %403 = vmatprep.subr.mxu0 %v370
    %404 = vmatpush1.msra.mxu0 %v369
    %405 = vmatprep.subr.mxu0 %v368
    %406 = vmatpush1.msra.mxu0 %v367
    %407 = vmatprep.subr.mxu0 %v366
    %408 = vmatpush1.msra.mxu0 %v365
    %409 = vmatprep.subr.mxu0 %v364
    %410 = vmatpush1.msra.mxu0 %v363
    %411 = vmatprep.subr.mxu0 %v362
    %412 = vmatpush1.msra.mxu0 %v361
    %413 = vmatprep.subr.mxu0 %v360
    %414 = vmatpush1.msra.mxu0 %v359
    %415 = vmatprep.subr.mxu0 %v358
    %416 = vmatpush1.msra.mxu0 %v357
    %417 = vmatprep.subr.mxu0 %v356
    %418 = vmatpush1.msra.mxu0 %v355
    %419 = vmatprep.subr.mxu0 0.0
    %420 = vmatpush2.msra.mxu0 0.0
    %421 = vmatprep.subr.mxu0 0.0
    %422 = vmatpush2.msra.mxu0 0.0
    %423 = vmatprep.subr.mxu0 0.0
    %424 = vmatpush2.msra.mxu0 0.0
    %425 = vmatprep.subr.mxu0 0.0
    %426 = vmatpush2.msra.mxu0 0.0
    %427 = vmatprep.subr.mxu0 0.0
    %428 = vmatpush2.msra.mxu0 0.0
    %429 = vmatprep.subr.mxu0 0.0
    %430 = vmatpush2.msra.mxu0 0.0
    %431 = vmatprep.subr.mxu0 0.0
    %432 = vmatpush2.msra.mxu0 0.0
    %433 = vmatprep.subr.mxu0 0.0
    %434 = vmatpush2.msra.mxu0 0.0
    %435 = vmatprep.subr.mxu0 0.0
    %436 = vmatpush2.msra.mxu0 0.0
    %437 = vmatprep.subr.mxu0 0.0
    %438 = vmatpush2.msra.mxu0 0.0
    %439 = vmatprep.subr.mxu0 0.0
    %440 = vmatpush2.msra.mxu0 0.0
    %441 = vmatprep.subr.mxu0 0.0
    %442 = vmatpush2.msra.mxu0 0.0
    %443 = vmatprep.subr.mxu0 0.0
    %444 = vmatpush2.msra.mxu0 0.0
    %445 = vmatprep.subr.mxu0 0.0
    %446 = vmatpush2.msra.mxu0 0.0
    %447 = vmatprep.subr.mxu0 0.0
    %448 = vmatpush2.msra.mxu0 0.0
    %449 = vmatprep.subr.mxu0 0.0
    %450 = vmatpush2.msra.mxu0 0.0
    %451 = vmatprep.mubr.f32.mxu0 0.0
    %452 = vmatmul.mubr.f32.gmra.mxu0 %v354
    %v453 = vpop.f32.mrf.mxu0
    %v454 = vadd.f32 0.0, %v453
    %v455 = vpop.f32.mrf.mxu0
    %v456 = vadd.f32 0.0, %v455
    %457 = vdwg.mxu0
    %v458 = vlaneseq
    %v459 = vshrl.u32 %v458, 7
    %v460 = vadd.s32 %v459, 8
    %v461 = vadd.s32 %v459, 16
    %v462 = vadd.s32 %v459, 24
    %v463 = vadd.s32 %v459, 32
    %v464 = vadd.s32 %v459, 40
    %v465 = vadd.s32 %v459, 48
    %v466 = vadd.s32 %v459, 56
    %v467 = vadd.s32 %v459, 64
    %v468 = vadd.s32 %v459, 72
    %v469 = vadd.s32 %v459, 80
    %v470 = vadd.s32 %v459, 88
    %v471 = vadd.s32 %v459, 96
    %v472 = vadd.s32 %v459, 104
    %v473 = vadd.s32 %v459, 112
    %v474 = vadd.s32 %v459, 120
    %v475 = vmul.u32 %v87, 32
    %vm476 = vcmp.ge.s32.totalorder %v459, %v475
    %vm477 = vcmp.ge.s32.totalorder %v460, %v475
    %vm478 = vcmp.ge.s32.totalorder %v461, %v475
    %vm479 = vcmp.ge.s32.totalorder %v462, %v475
    %vm480 = vcmp.ge.s32.totalorder %v463, %v475
    %vm481 = vcmp.ge.s32.totalorder %v464, %v475
    %vm482 = vcmp.ge.s32.totalorder %v465, %v475
    %vm483 = vcmp.ge.s32.totalorder %v466, %v475
    %vm484 = vcmp.ge.s32.totalorder %v467, %v475
    %vm485 = vcmp.ge.s32.totalorder %v468, %v475
    %vm486 = vcmp.ge.s32.totalorder %v469, %v475
    %vm487 = vcmp.ge.s32.totalorder %v470, %v475
    %vm488 = vcmp.ge.s32.totalorder %v471, %v475
    %vm489 = vcmp.ge.s32.totalorder %v472, %v475
    %vm490 = vcmp.ge.s32.totalorder %v473, %v475
    %vm491 = vcmp.ge.s32.totalorder %v474, %v475
    %v492 = vadd.s32 %v87, 1
    %v493 = vmul.u32 %v492, 32
    %vm494 = vcmp.lt.s32.totalorder %v459, %v493
    %vm495 = vcmp.lt.s32.totalorder %v460, %v493
    %vm496 = vcmp.lt.s32.totalorder %v461, %v493
    %vm497 = vcmp.lt.s32.totalorder %v462, %v493
    %vm498 = vcmp.lt.s32.totalorder %v463, %v493
    %vm499 = vcmp.lt.s32.totalorder %v464, %v493
    %vm500 = vcmp.lt.s32.totalorder %v465, %v493
    %vm501 = vcmp.lt.s32.totalorder %v466, %v493
    %vm502 = vcmp.lt.s32.totalorder %v467, %v493
    %vm503 = vcmp.lt.s32.totalorder %v468, %v493
    %vm504 = vcmp.lt.s32.totalorder %v469, %v493
    %vm505 = vcmp.lt.s32.totalorder %v470, %v493
    %vm506 = vcmp.lt.s32.totalorder %v471, %v493
    %vm507 = vcmp.lt.s32.totalorder %v472, %v493
    %vm508 = vcmp.lt.s32.totalorder %v473, %v493
    %vm509 = vcmp.lt.s32.totalorder %v474, %v493
    %vm510 = vmand %vm476, %vm494
    %vm511 = vmand %vm477, %vm495
    %vm512 = vmand %vm478, %vm496
    %vm513 = vmand %vm479, %vm497
    %vm514 = vmand %vm480, %vm498
    %vm515 = vmand %vm481, %vm499
    %vm516 = vmand %vm482, %vm500
    %vm517 = vmand %vm483, %vm501
    %vm518 = vmand %vm484, %vm502
    %vm519 = vmand %vm485, %vm503
    %vm520 = vmand %vm486, %vm504
    %vm521 = vmand %vm487, %vm505
    %vm522 = vmand %vm488, %vm506
    %vm523 = vmand %vm489, %vm507
    %vm524 = vmand %vm490, %vm508
    %vm525 = vmand %vm491, %vm509
    %v526 = vsel %vm510, 1, 0
    %v527 = vsel %vm511, 1, 0
    %v528 = vsel %vm512, 1, 0
    %v529 = vsel %vm513, 1, 0
    %v530 = vsel %vm514, 1, 0
    %v531 = vsel %vm515, 1, 0
    %v532 = vsel %vm516, 1, 0
    %v533 = vsel %vm517, 1, 0
    %v534 = vsel %vm518, 1, 0
    %v535 = vsel %vm519, 1, 0
    %v536 = vsel %vm520, 1, 0
    %v537 = vsel %vm521, 1, 0
    %v538 = vsel %vm522, 1, 0
    %v539 = vsel %vm523, 1, 0
    %v540 = vsel %vm524, 1, 0
    %v541 = vsel %vm525, 1, 0
    %v542 = vcvt.s32.f32 %v526
    %v543 = vcvt.s32.f32 %v527
    %v544 = vcvt.s32.f32 %v528
    %v545 = vcvt.s32.f32 %v529
    %v546 = vcvt.s32.f32 %v530
    %v547 = vcvt.s32.f32 %v531
    %v548 = vcvt.s32.f32 %v532
    %v549 = vcvt.s32.f32 %v533
    %v550 = vcvt.s32.f32 %v534
    %v551 = vcvt.s32.f32 %v535
    %v552 = vcvt.s32.f32 %v536
    %v553 = vcvt.s32.f32 %v537
    %v554 = vcvt.s32.f32 %v538
    %v555 = vcvt.s32.f32 %v539
    %v556 = vcvt.s32.f32 %v540
    %v557 = vcvt.s32.f32 %v541
    %v558 = vmul.u32 %v459, 32
    %vm559 = vcmp.ge.s32.totalorder %v87, %v558
    %v560 = vadd.s32 %v459, 1
    %v561 = vmul.u32 %v560, 32
    %vm562 = vcmp.lt.s32.totalorder %v87, %v561
    %vm563 = vmand %vm559, %vm562
    %v564 = vsel %vm563, 1, 0
    %v565 = vcvt.s32.f32 %v564
    %vm566 = vcmp.eq.s32.totalorder %v459, %v87
    %vm567 = vcmp.eq.s32.totalorder %v460, %v87
    %vm568 = vcmp.eq.s32.totalorder %v461, %v87
    %vm569 = vcmp.eq.s32.totalorder %v462, %v87
    %vm570 = vcmp.eq.s32.totalorder %v463, %v87
    %vm571 = vcmp.eq.s32.totalorder %v464, %v87
    %vm572 = vcmp.eq.s32.totalorder %v465, %v87
    %vm573 = vcmp.eq.s32.totalorder %v466, %v87
    %vm574 = vcmp.eq.s32.totalorder %v467, %v87
    %vm575 = vcmp.eq.s32.totalorder %v468, %v87
    %vm576 = vcmp.eq.s32.totalorder %v469, %v87
    %vm577 = vcmp.eq.s32.totalorder %v470, %v87
    %vm578 = vcmp.eq.s32.totalorder %v471, %v87
    %vm579 = vcmp.eq.s32.totalorder %v472, %v87
    %vm580 = vcmp.eq.s32.totalorder %v473, %v87
    %vm581 = vcmp.eq.s32.totalorder %v474, %v87
    %v582 = vsel %vm566, 1, 0
    %v583 = vsel %vm567, 1, 0
    %v584 = vsel %vm568, 1, 0
    %v585 = vsel %vm569, 1, 0
    %v586 = vsel %vm570, 1, 0
    %v587 = vsel %vm571, 1, 0
    %v588 = vsel %vm572, 1, 0
    %v589 = vsel %vm573, 1, 0
    %v590 = vsel %vm574, 1, 0
    %v591 = vsel %vm575, 1, 0
    %v592 = vsel %vm576, 1, 0
    %v593 = vsel %vm577, 1, 0
    %v594 = vsel %vm578, 1, 0
    %v595 = vsel %vm579, 1, 0
    %v596 = vsel %vm580, 1, 0
    %v597 = vsel %vm581, 1, 0
    %v598 = vcvt.s32.f32 %v582
    %v599 = vcvt.s32.f32 %v583
    %v600 = vcvt.s32.f32 %v584
    %v601 = vcvt.s32.f32 %v585
    %v602 = vcvt.s32.f32 %v586
    %v603 = vcvt.s32.f32 %v587
    %v604 = vcvt.s32.f32 %v588
    %v605 = vcvt.s32.f32 %v589
    %v606 = vcvt.s32.f32 %v590
    %v607 = vcvt.s32.f32 %v591
    %v608 = vcvt.s32.f32 %v592
    %v609 = vcvt.s32.f32 %v593
    %v610 = vcvt.s32.f32 %v594
    %v611 = vcvt.s32.f32 %v595
    %v612 = vcvt.s32.f32 %v596
    %v613 = vcvt.s32.f32 %v597
    %v614 = vadd.f32 %v598, 0.0
    %v615 = vadd.f32 %v599, 0.0
    %v616 = vadd.f32 %v600, 0.0
    %v617 = vadd.f32 %v601, 0.0
    %v618 = vadd.f32 %v602, 0.0
    %v619 = vadd.f32 %v603, 0.0
    %v620 = vadd.f32 %v604, 0.0
    %v621 = vadd.f32 %v605, 0.0
    %v622 = vadd.f32 %v606, 0.0
    %v623 = vadd.f32 %v607, 0.0
    %v624 = vadd.f32 %v608, 0.0
    %v625 = vadd.f32 %v609, 0.0
    %v626 = vadd.f32 %v610, 0.0
    %v627 = vadd.f32 %v611, 0.0
    %v628 = vadd.f32 %v612, 0.0
    %v629 = vadd.f32 %v613, 0.0
    %v630 = vadd.s32 %v87, 32
    %vm631 = vcmp.eq.s32.totalorder %v459, %v630
    %vm632 = vcmp.eq.s32.totalorder %v460, %v630
    %vm633 = vcmp.eq.s32.totalorder %v461, %v630
    %vm634 = vcmp.eq.s32.totalorder %v462, %v630
    %vm635 = vcmp.eq.s32.totalorder %v463, %v630
    %vm636 = vcmp.eq.s32.totalorder %v464, %v630
    %vm637 = vcmp.eq.s32.totalorder %v465, %v630
    %vm638 = vcmp.eq.s32.totalorder %v466, %v630
    %vm639 = vcmp.eq.s32.totalorder %v467, %v630
    %vm640 = vcmp.eq.s32.totalorder %v468, %v630
    %vm641 = vcmp.eq.s32.totalorder %v469, %v630
    %vm642 = vcmp.eq.s32.totalorder %v470, %v630
    %vm643 = vcmp.eq.s32.totalorder %v471, %v630
    %vm644 = vcmp.eq.s32.totalorder %v472, %v630
    %vm645 = vcmp.eq.s32.totalorder %v473, %v630
    %vm646 = vcmp.eq.s32.totalorder %v474, %v630
    %v647 = vsel %vm631, 1, 0
    %v648 = vsel %vm632, 1, 0
    %v649 = vsel %vm633, 1, 0
    %v650 = vsel %vm634, 1, 0
    %v651 = vsel %vm635, 1, 0
    %v652 = vsel %vm636, 1, 0
    %v653 = vsel %vm637, 1, 0
    %v654 = vsel %vm638, 1, 0
    %v655 = vsel %vm639, 1, 0
    %v656 = vsel %vm640, 1, 0
    %v657 = vsel %vm641, 1, 0
    %v658 = vsel %vm642, 1, 0
    %v659 = vsel %vm643, 1, 0
    %v660 = vsel %vm644, 1, 0
    %v661 = vsel %vm645, 1, 0
    %v662 = vsel %vm646, 1, 0
    %v663 = vcvt.s32.f32 %v647
    %v664 = vcvt.s32.f32 %v648
    %v665 = vcvt.s32.f32 %v649
    %v666 = vcvt.s32.f32 %v650
    %v667 = vcvt.s32.f32 %v651
    %v668 = vcvt.s32.f32 %v652
    %v669 = vcvt.s32.f32 %v653
    %v670 = vcvt.s32.f32 %v654
    %v671 = vcvt.s32.f32 %v655
    %v672 = vcvt.s32.f32 %v656
    %v673 = vcvt.s32.f32 %v657
    %v674 = vcvt.s32.f32 %v658
    %v675 = vcvt.s32.f32 %v659
    %v676 = vcvt.s32.f32 %v660
    %v677 = vcvt.s32.f32 %v661
    %v678 = vcvt.s32.f32 %v662
    %v679 = vadd.f32 %v614, %v663
    %v680 = vadd.f32 %v615, %v664
    %v681 = vadd.f32 %v616, %v665
    %v682 = vadd.f32 %v617, %v666
    %v683 = vadd.f32 %v618, %v667
    %v684 = vadd.f32 %v619, %v668
    %v685 = vadd.f32 %v620, %v669
    %v686 = vadd.f32 %v621, %v670
    %v687 = vadd.f32 %v622, %v671
    %v688 = vadd.f32 %v623, %v672
    %v689 = vadd.f32 %v624, %v673
    %v690 = vadd.f32 %v625, %v674
    %v691 = vadd.f32 %v626, %v675
    %v692 = vadd.f32 %v627, %v676
    %v693 = vadd.f32 %v628, %v677
    %v694 = vadd.f32 %v629, %v678
    %v695 = vadd.s32 %v87, 64
    %vm696 = vcmp.eq.s32.totalorder %v459, %v695
    %vm697 = vcmp.eq.s32.totalorder %v460, %v695
    %vm698 = vcmp.eq.s32.totalorder %v461, %v695
    %vm699 = vcmp.eq.s32.totalorder %v462, %v695
    %vm700 = vcmp.eq.s32.totalorder %v463, %v695
    %vm701 = vcmp.eq.s32.totalorder %v464, %v695
    %vm702 = vcmp.eq.s32.totalorder %v465, %v695
    %vm703 = vcmp.eq.s32.totalorder %v466, %v695
    %vm704 = vcmp.eq.s32.totalorder %v467, %v695
    %vm705 = vcmp.eq.s32.totalorder %v468, %v695
    %vm706 = vcmp.eq.s32.totalorder %v469, %v695
    %vm707 = vcmp.eq.s32.totalorder %v470, %v695
    %vm708 = vcmp.eq.s32.totalorder %v471, %v695
    %vm709 = vcmp.eq.s32.totalorder %v472, %v695
    %vm710 = vcmp.eq.s32.totalorder %v473, %v695
    %vm711 = vcmp.eq.s32.totalorder %v474, %v695
    %v712 = vsel %vm696, 1, 0
    %v713 = vsel %vm697, 1, 0
    %v714 = vsel %vm698, 1, 0
    %v715 = vsel %vm699, 1, 0
    %v716 = vsel %vm700, 1, 0
    %v717 = vsel %vm701, 1, 0
    %v718 = vsel %vm702, 1, 0
    %v719 = vsel %vm703, 1, 0
    %v720 = vsel %vm704, 1, 0
    %v721 = vsel %vm705, 1, 0
    %v722 = vsel %vm706, 1, 0
    %v723 = vsel %vm707, 1, 0
    %v724 = vsel %vm708, 1, 0
    %v725 = vsel %vm709, 1, 0
    %v726 = vsel %vm710, 1, 0
    %v727 = vsel %vm711, 1, 0
    %v728 = vcvt.s32.f32 %v712
    %v729 = vcvt.s32.f32 %v713
    %v730 = vcvt.s32.f32 %v714
    %v731 = vcvt.s32.f32 %v715
    %v732 = vcvt.s32.f32 %v716
    %v733 = vcvt.s32.f32 %v717
    %v734 = vcvt.s32.f32 %v718
    %v735 = vcvt.s32.f32 %v719
    %v736 = vcvt.s32.f32 %v720
    %v737 = vcvt.s32.f32 %v721
    %v738 = vcvt.s32.f32 %v722
    %v739 = vcvt.s32.f32 %v723
    %v740 = vcvt.s32.f32 %v724
    %v741 = vcvt.s32.f32 %v725
    %v742 = vcvt.s32.f32 %v726
    %v743 = vcvt.s32.f32 %v727
    %v744 = vadd.f32 %v679, %v728
    %v745 = vadd.f32 %v680, %v729
    %v746 = vadd.f32 %v681, %v730
    %v747 = vadd.f32 %v682, %v731
    %v748 = vadd.f32 %v683, %v732
    %v749 = vadd.f32 %v684, %v733
    %v750 = vadd.f32 %v685, %v734
    %v751 = vadd.f32 %v686, %v735
    %v752 = vadd.f32 %v687, %v736
    %v753 = vadd.f32 %v688, %v737
    %v754 = vadd.f32 %v689, %v738
    %v755 = vadd.f32 %v690, %v739
    %v756 = vadd.f32 %v691, %v740
    %v757 = vadd.f32 %v692, %v741
    %v758 = vadd.f32 %v693, %v742
    %v759 = vadd.f32 %v694, %v743
    %v760 = vadd.s32 %v87, 96
    %vm761 = vcmp.eq.s32.totalorder %v459, %v760
    %vm762 = vcmp.eq.s32.totalorder %v460, %v760
    %vm763 = vcmp.eq.s32.totalorder %v461, %v760
    %vm764 = vcmp.eq.s32.totalorder %v462, %v760
    %vm765 = vcmp.eq.s32.totalorder %v463, %v760
    %vm766 = vcmp.eq.s32.totalorder %v464, %v760
    %vm767 = vcmp.eq.s32.totalorder %v465, %v760
    %vm768 = vcmp.eq.s32.totalorder %v466, %v760
    %vm769 = vcmp.eq.s32.totalorder %v467, %v760
    %vm770 = vcmp.eq.s32.totalorder %v468, %v760
    %vm771 = vcmp.eq.s32.totalorder %v469, %v760
    %vm772 = vcmp.eq.s32.totalorder %v470, %v760
    %vm773 = vcmp.eq.s32.totalorder %v471, %v760
    %vm774 = vcmp.eq.s32.totalorder %v472, %v760
    %vm775 = vcmp.eq.s32.totalorder %v473, %v760
    %vm776 = vcmp.eq.s32.totalorder %v474, %v760
    %v777 = vsel %vm761, 1, 0
    %v778 = vsel %vm762, 1, 0
    %v779 = vsel %vm763, 1, 0
    %v780 = vsel %vm764, 1, 0
    %v781 = vsel %vm765, 1, 0
    %v782 = vsel %vm766, 1, 0
    %v783 = vsel %vm767, 1, 0
    %v784 = vsel %vm768, 1, 0
    %v785 = vsel %vm769, 1, 0
    %v786 = vsel %vm770, 1, 0
    %v787 = vsel %vm771, 1, 0
    %v788 = vsel %vm772, 1, 0
    %v789 = vsel %vm773, 1, 0
    %v790 = vsel %vm774, 1, 0
    %v791 = vsel %vm775, 1, 0
    %v792 = vsel %vm776, 1, 0
    %v793 = vcvt.s32.f32 %v777
    %v794 = vcvt.s32.f32 %v778
    %v795 = vcvt.s32.f32 %v779
    %v796 = vcvt.s32.f32 %v780
    %v797 = vcvt.s32.f32 %v781
    %v798 = vcvt.s32.f32 %v782
    %v799 = vcvt.s32.f32 %v783
    %v800 = vcvt.s32.f32 %v784
    %v801 = vcvt.s32.f32 %v785
    %v802 = vcvt.s32.f32 %v786
    %v803 = vcvt.s32.f32 %v787
    %v804 = vcvt.s32.f32 %v788
    %v805 = vcvt.s32.f32 %v789
    %v806 = vcvt.s32.f32 %v790
    %v807 = vcvt.s32.f32 %v791
    %v808 = vcvt.s32.f32 %v792
    %v809 = vadd.f32 %v744, %v793
    %v810 = vadd.f32 %v745, %v794
    %v811 = vadd.f32 %v746, %v795
    %v812 = vadd.f32 %v747, %v796
    %v813 = vadd.f32 %v748, %v797
    %v814 = vadd.f32 %v749, %v798
    %v815 = vadd.f32 %v750, %v799
    %v816 = vadd.f32 %v751, %v800
    %v817 = vadd.f32 %v752, %v801
    %v818 = vadd.f32 %v753, %v802
    %v819 = vadd.f32 %v754, %v803
    %v820 = vadd.f32 %v755, %v804
    %v821 = vadd.f32 %v756, %v805
    %v822 = vadd.f32 %v757, %v806
    %v823 = vadd.f32 %v758, %v807
    %v824 = vadd.f32 %v759, %v808
    %v825 = vmul.f32 %v454, %v171
    %v826 = vmul.f32 %v456, %v456
    %827 = vmatprep.subr.mxu0 0.0
    %828 = vmatpush1.msra.mxu0 %v557
    %829 = vmatprep.subr.mxu0 0.0
    %830 = vmatpush1.msra.mxu0 %v556
    %831 = vmatprep.subr.mxu0 0.0
    %832 = vmatpush1.msra.mxu0 %v555
    %833 = vmatprep.subr.mxu0 0.0
    %834 = vmatpush1.msra.mxu0 %v554
    %835 = vmatprep.subr.mxu0 0.0
    %836 = vmatpush1.msra.mxu0 %v553
    %837 = vmatprep.subr.mxu0 0.0
    %838 = vmatpush1.msra.mxu0 %v552
    %839 = vmatprep.subr.mxu0 0.0
    %840 = vmatpush1.msra.mxu0 %v551
    %841 = vmatprep.subr.mxu0 0.0
    %842 = vmatpush1.msra.mxu0 %v550
    %843 = vmatprep.subr.mxu0 0.0
    %844 = vmatpush1.msra.mxu0 %v549
    %845 = vmatprep.subr.mxu0 0.0
    %846 = vmatpush1.msra.mxu0 %v548
    %847 = vmatprep.subr.mxu0 0.0
    %848 = vmatpush1.msra.mxu0 %v547
    %849 = vmatprep.subr.mxu0 0.0
    %850 = vmatpush1.msra.mxu0 %v546
    %851 = vmatprep.subr.mxu0 0.0
    %852 = vmatpush1.msra.mxu0 %v545
    %853 = vmatprep.subr.mxu0 0.0
    %854 = vmatpush1.msra.mxu0 %v544
    %855 = vmatprep.subr.mxu0 0.0
    %856 = vmatpush1.msra.mxu0 %v543
    %857 = vmatprep.subr.mxu0 0.0
    %858 = vmatpush1.msra.mxu0 %v542
    %859 = vmatprep.subr.mxu0 0.0
    %860 = vmatpush2.msra.mxu0 0.0
    %861 = vmatprep.subr.mxu0 0.0
    %862 = vmatpush2.msra.mxu0 0.0
    %863 = vmatprep.subr.mxu0 0.0
    %864 = vmatpush2.msra.mxu0 0.0
    %865 = vmatprep.subr.mxu0 0.0
    %866 = vmatpush2.msra.mxu0 0.0
    %867 = vmatprep.subr.mxu0 0.0
    %868 = vmatpush2.msra.mxu0 0.0
    %869 = vmatprep.subr.mxu0 0.0
    %870 = vmatpush2.msra.mxu0 0.0
    %871 = vmatprep.subr.mxu0 0.0
    %872 = vmatpush2.msra.mxu0 0.0
    %873 = vmatprep.subr.mxu0 0.0
    %874 = vmatpush2.msra.mxu0 0.0
    %875 = vmatprep.subr.mxu0 0.0
    %876 = vmatpush2.msra.mxu0 0.0
    %877 = vmatprep.subr.mxu0 0.0
    %878 = vmatpush2.msra.mxu0 0.0
    %879 = vmatprep.subr.mxu0 0.0
    %880 = vmatpush2.msra.mxu0 0.0
    %881 = vmatprep.subr.mxu0 0.0
    %882 = vmatpush2.msra.mxu0 0.0
    %883 = vmatprep.subr.mxu0 0.0
    %884 = vmatpush2.msra.mxu0 0.0
    %885 = vmatprep.subr.mxu0 0.0
    %886 = vmatpush2.msra.mxu0 0.0
    %887 = vmatprep.subr.mxu0 0.0
    %888 = vmatpush2.msra.mxu0 0.0
    %889 = vmatprep.subr.mxu0 0.0
    %890 = vmatpush2.msra.mxu0 0.0
    %891 = vmatprep.mubr.f32.mxu0 0.0
    %892 = vmatmul.mubr.f32.gmra.mxu0 %v825
    %v893 = vpop.f32.mrf.mxu0
    %v894 = vadd.f32 0.0, %v893
    %v895 = vpop.f32.mrf.mxu0
    %896 = vmatprep.mubr.f32.mxu0 0.0
    %897 = vmatmul.mubr.f32.gmra.mxu0 %v826
    %v898 = vpop.f32.mrf.mxu0
    %v899 = vadd.f32 0.0, %v898
    %v900 = vpop.f32.mrf.mxu0
    %901 = vdwg.mxu0
    %vm902 = vcmask 31744
    %v903 = vsel %vm902, %v894, -inf
    %904 = vmax.xlane.f32.xlu0 %v903
    %v905 = vpop.xlane.xlu0 %904
    %v906 = vsub.f32 %v894, %v905
    %v907 = vmul.f32 %v906, 1.442695
    %v908 = vpow.pop %v907
    %v909 = vsel %vm902, %v908, 0.0
    %910 = vadd.xlane.f32.xlu0 %v909
    %v911 = vpop.xlane.xlu0 %910
    %v912 = vrcp.pop %v911
    %v913 = vmul.f32 %v908, %v912
    %v914 = vmax.f32 %v899, 1e-24
    %v915 = vrsqrt.pop %v914
    %v917 = vsel %vm902, %v913, 0
    %v920 = vsel %vm902, %v915, 0
    %vm922 = vcmask 1043456
    %v924 = vsel %vm922, %v565, 0
    %926 = vmatprep.subr.mxu0 0.0
    %927 = vmatpush1.msra.mxu0 0.0
    %928 = vmatprep.subr.mxu0 0.0
    %929 = vmatpush1.msra.mxu0 0.0
    %930 = vmatprep.subr.mxu0 0.0
    %931 = vmatpush1.msra.mxu0 0.0
    %932 = vmatprep.subr.mxu0 0.0
    %933 = vmatpush1.msra.mxu0 0.0
    %934 = vmatprep.subr.mxu0 0.0
    %935 = vmatpush1.msra.mxu0 0.0
    %936 = vmatprep.subr.mxu0 0.0
    %937 = vmatpush1.msra.mxu0 0.0
    %938 = vmatprep.subr.mxu0 0.0
    %939 = vmatpush1.msra.mxu0 0.0
    %940 = vmatprep.subr.mxu0 0.0
    %941 = vmatpush1.msra.mxu0 0.0
    %942 = vmatprep.subr.mxu0 0.0
    %943 = vmatpush1.msra.mxu0 0.0
    %944 = vmatprep.subr.mxu0 0.0
    %945 = vmatpush1.msra.mxu0 0.0
    %946 = vmatprep.subr.mxu0 0.0
    %947 = vmatpush1.msra.mxu0 0.0
    %948 = vmatprep.subr.mxu0 0.0
    %949 = vmatpush1.msra.mxu0 0.0
    %950 = vmatprep.subr.mxu0 0.0
    %951 = vmatpush1.msra.mxu0 0.0
    %952 = vmatprep.subr.mxu0 0.0
    %953 = vmatpush1.msra.mxu0 0.0
    %954 = vmatprep.subr.mxu0 0.0
    %955 = vmatpush1.msra.mxu0 0.0
    %956 = vmatprep.subr.mxu0 0.0
    %957 = vmatpush1.msra.mxu0 %v924
    %958 = vmatprep.subr.mxu0 0.0
    %959 = vmatpush2.msra.mxu0 0.0
    %960 = vmatprep.subr.mxu0 0.0
    %961 = vmatpush2.msra.mxu0 0.0
    %962 = vmatprep.subr.mxu0 0.0
    %963 = vmatpush2.msra.mxu0 0.0
    %964 = vmatprep.subr.mxu0 0.0
    %965 = vmatpush2.msra.mxu0 0.0
    %966 = vmatprep.subr.mxu0 0.0
    %967 = vmatpush2.msra.mxu0 0.0
    %968 = vmatprep.subr.mxu0 0.0
    %969 = vmatpush2.msra.mxu0 0.0
    %970 = vmatprep.subr.mxu0 0.0
    %971 = vmatpush2.msra.mxu0 0.0
    %972 = vmatprep.subr.mxu0 0.0
    %973 = vmatpush2.msra.mxu0 0.0
    %974 = vmatprep.subr.mxu0 0.0
    %975 = vmatpush2.msra.mxu0 0.0
    %976 = vmatprep.subr.mxu0 0.0
    %977 = vmatpush2.msra.mxu0 0.0
    %978 = vmatprep.subr.mxu0 0.0
    %979 = vmatpush2.msra.mxu0 0.0
    %980 = vmatprep.subr.mxu0 0.0
    %981 = vmatpush2.msra.mxu0 0.0
    %982 = vmatprep.subr.mxu0 0.0
    %983 = vmatpush2.msra.mxu0 0.0
    %984 = vmatprep.subr.mxu0 0.0
    %985 = vmatpush2.msra.mxu0 0.0
    %986 = vmatprep.subr.mxu0 0.0
    %987 = vmatpush2.msra.mxu0 0.0
    %988 = vmatprep.subr.mxu0 0.0
    %989 = vmatpush2.msra.mxu0 0.0
    %990 = vmatprep.mubr.f32.mxu0 0.0
    %991 = vmatmul.mubr.f32.gmra.mxu0 %v917
    %v992 = vpop.f32.mrf.mxu0
    %v993 = vadd.f32 0.0, %v992
    %v994 = vpop.f32.mrf.mxu0
    %995 = vmatprep.mubr.f32.mxu0 0.0
    %996 = vmatmul.mubr.f32.gmra.mxu0 %v920
    %v997 = vpop.f32.mrf.mxu0
    %v998 = vadd.f32 0.0, %v997
    %v999 = vpop.f32.mrf.mxu0
    %1000 = vdwg.mxu0
    %v1001 = vmul.f32 %v456, %v998
    %v1002 = vmul.f32 %v993, %v456
    %1003 = vmatprep.subr.mxu0 0.0
    %1004 = vmatpush1.msra.mxu0 %v824
    %1005 = vmatprep.subr.mxu0 0.0
    %1006 = vmatpush1.msra.mxu0 %v823
    %1007 = vmatprep.subr.mxu0 0.0
    %1008 = vmatpush1.msra.mxu0 %v822
    %1009 = vmatprep.subr.mxu0 0.0
    %1010 = vmatpush1.msra.mxu0 %v821
    %1011 = vmatprep.subr.mxu0 0.0
    %1012 = vmatpush1.msra.mxu0 %v820
    %1013 = vmatprep.subr.mxu0 0.0
    %1014 = vmatpush1.msra.mxu0 %v819
    %1015 = vmatprep.subr.mxu0 0.0
    %1016 = vmatpush1.msra.mxu0 %v818
    %1017 = vmatprep.subr.mxu0 0.0
    %1018 = vmatpush1.msra.mxu0 %v817
    %1019 = vmatprep.subr.mxu0 0.0
    %1020 = vmatpush1.msra.mxu0 %v816
    %1021 = vmatprep.subr.mxu0 0.0
    %1022 = vmatpush1.msra.mxu0 %v815
    %1023 = vmatprep.subr.mxu0 0.0
    %1024 = vmatpush1.msra.mxu0 %v814
    %1025 = vmatprep.subr.mxu0 0.0
    %1026 = vmatpush1.msra.mxu0 %v813
    %1027 = vmatprep.subr.mxu0 0.0
    %1028 = vmatpush1.msra.mxu0 %v812
    %1029 = vmatprep.subr.mxu0 0.0
    %1030 = vmatpush1.msra.mxu0 %v811
    %1031 = vmatprep.subr.mxu0 0.0
    %1032 = vmatpush1.msra.mxu0 %v810
    %1033 = vmatprep.subr.mxu0 0.0
    %1034 = vmatpush1.msra.mxu0 %v809
    %1035 = vmatprep.subr.mxu0 0.0
    %1036 = vmatpush2.msra.mxu0 0.0
    %1037 = vmatprep.subr.mxu0 0.0
    %1038 = vmatpush2.msra.mxu0 0.0
    %1039 = vmatprep.subr.mxu0 0.0
    %1040 = vmatpush2.msra.mxu0 0.0
    %1041 = vmatprep.subr.mxu0 0.0
    %1042 = vmatpush2.msra.mxu0 0.0
    %1043 = vmatprep.subr.mxu0 0.0
    %1044 = vmatpush2.msra.mxu0 0.0
    %1045 = vmatprep.subr.mxu0 0.0
    %1046 = vmatpush2.msra.mxu0 0.0
    %1047 = vmatprep.subr.mxu0 0.0
    %1048 = vmatpush2.msra.mxu0 0.0
    %1049 = vmatprep.subr.mxu0 0.0
    %1050 = vmatpush2.msra.mxu0 0.0
    %1051 = vmatprep.subr.mxu0 0.0
    %1052 = vmatpush2.msra.mxu0 0.0
    %1053 = vmatprep.subr.mxu0 0.0
    %1054 = vmatpush2.msra.mxu0 0.0
    %1055 = vmatprep.subr.mxu0 0.0
    %1056 = vmatpush2.msra.mxu0 0.0
    %1057 = vmatprep.subr.mxu0 0.0
    %1058 = vmatpush2.msra.mxu0 0.0
    %1059 = vmatprep.subr.mxu0 0.0
    %1060 = vmatpush2.msra.mxu0 0.0
    %1061 = vmatprep.subr.mxu0 0.0
    %1062 = vmatpush2.msra.mxu0 0.0
    %1063 = vmatprep.subr.mxu0 0.0
    %1064 = vmatpush2.msra.mxu0 0.0
    %1065 = vmatprep.subr.mxu0 0.0
    %1066 = vmatpush2.msra.mxu0 0.0
    %1067 = vmatprep.mubr.f32.mxu0 0.0
    %1068 = vmatmul.mubr.f32.gmra.mxu0 %v1002
    %v1069 = vpop.f32.mrf.mxu0
    %v1070 = vadd.f32 0.0, %v1069
    %v1071 = vpop.f32.mrf.mxu0
    %1072 = vmatprep.mubr.f32.mxu0 0.0
    %1073 = vmatmul.mubr.f32.gmra.mxu0 %v1001
    %v1074 = vpop.f32.mrf.mxu0
    %v1075 = vadd.f32 0.0, %v1074
    %v1076 = vpop.f32.mrf.mxu0
    %1077 = vdwg.mxu0
    %1078 = vst.msk [vmem:[#allocation10] sm:$0xff] %vm186, %v1070
    %v1079 = vmul.f32 %v1075, %v1075
    %v1080 = vsel %vm186, %v1079, 0.0
    %1081 = vadd.xlane.f32.xlu0 %v1080
    %v1082 = vpop.xlane.xlu0 %1081
    %v1083 = vmul.f32 %v1001, %v1001
    %1084 = vadd.xlane.f32.xlu0 %v1083
    %v1085 = vpop.xlane.xlu0 %1084
    %v1086 = vsub.f32 %v1082, %v1085
    %v1087 = vmul.f32 %v1086, 0.5
    %v1088 = vrot.slane %v1087, 4
    %v1089 = vadd.f32 %v1087, %v1088
    %v1090 = vrot.slane %v1089, 2
    %v1091 = vadd.f32 %v1089, %v1090
    %v1092 = vrot.slane %v1091, 1
    %v1093 = vadd.f32 %v1091, %v1092
    %v1094 = vrcp.pop 48.0
    %v1095 = vmul.f32 %v1093, %v1094
    %v1096 = vadd.f32 %v913, 1e-06
    %v1097 = vlog2.pop %v1096
    %v1098 = vmul.f32 %v1097, 0.6931472
    %v1099 = vsel %vm902, %v1098, 0.0
    %1100 = vadd.xlane.f32.xlu0 %v1099
    %v1101 = vpop.xlane.xlu0 %1100
    %v1102 = vmul.f32 %v1101, -0.0025
    %v1103 = vmul.f32 %v1095, 0.01
    %v1104 = vadd.f32 %v1102, %v1103
    %vm1105 = vcmask 7168
    %1106 = vst.msk [vmem:[%s9] sm:$0xff] %vm1105, %v1104
    // Predicated region
    $region50: #{tpu_custom_call.1} parent=1 // pred_check
      _
    $region51: #{tpu_custom_call.1} parent=1 // pred_check_branch
      %1108 = sbr.rel (0) target = $region53
    $region52: #{tpu_custom_call.1} parent=1 // pred_region
      %s1110 = ssub.s32 128, 128
      %1111 = vsyncadd [#allocation4], %s1110
      %s1113 = sshll.u32 [#allocation10], 4
      %s1114 = int_to_ptr.vmem [resolvable:$true] %s1113
      %1116 = dma.vmem_to_hbm [thread:$0]  %s1114, 128, %s8, [#allocation4]
    $region53: #{tpu_custom_call.1} parent=1 // pred_fallthru
      _
    // Predicated region
    $region54: #{tpu_custom_call.1} parent=1 // pred_check
      _
    $region55: #{tpu_custom_call.1} parent=1 // pred_check_branch
      %1118 = sbr.rel (0) target = $region57
    $region56: #{tpu_custom_call.1} parent=1 // pred_region
      _
    $region57: #{tpu_custom_call.1} parent=1 // pred_fallthru
      _
    // Predicated region
    $region58: #{tpu_custom_call.1} parent=1 // pred_check
      _
    $region59: #{tpu_custom_call.1} parent=1 // pred_check_branch
      %1120 = sbr.rel (0) target = $region61
    $region60: #{tpu_custom_call.1} parent=1 // pred_region
      %1121 = dma.done [#allocation4], 128
    $region61: #{tpu_custom_call.1} parent=1 // pred_fallthru
      _
    // Predicated region
    $region62: #{tpu_custom_call.1} parent=1 // pred_check
      _
    $region63: #{tpu_custom_call.1} parent=1 // pred_check_branch
      %1123 = sbr.rel (0) target = $region65
    $region64: #{tpu_custom_call.1} parent=1 // pred_region
      _
    $region65: #{tpu_custom_call.1} parent=1 // pred_fallthru
      _
    %1124 = vsyncpa [#allocation3], 1
    %1125 = vsyncpa [#allocation6], 1
    %1126 = vsyncpa [#allocation9], 1
    %1127 = vsyncpa [#allocation4], 1

</llo_original>
